<compile_context>
chip_gen: v6e
topology: v6e:2x2x1
jax: 0.10.0
libtpu: 0.0.40
codegen_flags: <defaults>
</compile_context>

<pallas_src>
import jax
import jax.numpy as jnp
from jax.experimental import pallas as pl
from jax.experimental.pallas import tpu as pltpu

OBS_RES = 20          # obs_resolution
B = 2                 # batch (static)
C_IN = 4
C1, K1 = 20, 3        # conv1: Conv1d(4, 20, 3, padding=1)
C2, K2 = 10, 5        # conv2: Conv1d(20, 10, 5, padding=2)
L1 = OBS_RES          # conv1 output length (20)
P1 = L1 // 2          # after first MaxPool1d(2) -> 10
L2 = P1               # conv2 output length (10)
P2 = L2 // 2          # after second MaxPool1d(2) -> 5
FLAT = C2 * OBS_RES // 4   # 50
H = 100
OUT = 6
LN_EPS = 1e-5
LANES = 128
_INV_SQRT2 = 0.7071067811865476


def _align8(n):
    return (n + 7) & ~7


# Weight-slab row layout (8-aligned offsets -> free static ref slices in-kernel).
W1_ROWS = K1 * C_IN + 1        # 13  (12 im2col weight rows + folded b1)
W2_ROWS = K2 * C1 + 1          # 101 (100 im2col weight rows + folded b2)
W3_ROWS = FLAT + 1             # 51  (gamma-folded w3 rows + (b3 + beta@w3) row)
W4_ROWS = H + 1                # 101 (w4 rows + folded b4)
W1_OFF = 0
W2_OFF = W1_OFF + _align8(W1_ROWS)     # 16
W3_OFF = W2_OFF + _align8(W2_ROWS)     # 120
W4_OFF = W3_OFF + _align8(W3_ROWS)     # 176
SLAB_ROWS = W4_OFF + _align8(W4_ROWS)  # 280


def _gelu(x):
    # exact (erf-based) GELU, matching torch.nn.GELU() default
    return 0.5 * x * (1.0 + jax.lax.erf(x * _INV_SQRT2))


def dual_cnn_kernel(cols1_ref, w_ref, out_ref):
    np1 = B * P1

    # ---- Conv1d(4 -> 20, k=3, p=1): one matmul, bias folded via ones column ----
    # cols1 rows: [even positions | odd positions], each half position-major /
    # batch-minor (row p*B + b), built in the wrapper.
    h1 = jnp.dot(cols1_ref[...], w_ref[W1_OFF:W1_OFF + W1_ROWS, 0:C1],
                 preferred_element_type=jnp.float32)               # (2*B*P1, C1)

    # ---- MaxPool1d(2): contiguous-halves max + exact GELU ----
    g1 = _gelu(jnp.maximum(h1[:np1, :], h1[np1:, :]))              # (B*P1, C1), row p*B+b

    # ---- Conv1d(20 -> 10, k=5, p=2): im2col built entirely in registers ----
    # Pad halo rows once, take K2 static sublane slices, lane-concatenate, append
    # a ones column for the folded bias, and feed straight to the matmul.
    halo = (K2 // 2) * B
    zpad = jnp.zeros((halo, C1), jnp.float32)
    g1p = jnp.concatenate([zpad, g1, zpad], axis=0)                # (B*P1 + 2*halo, C1)
    ones_r = jnp.ones((np1, 1), jnp.float32)
    cols2 = jnp.concatenate(
        [g1p[k * B:k * B + np1, :] for k in range(K2)] + [ones_r],
        axis=-1)                                                   # (B*P1, K2*C1 + 1)
    h2 = jnp.dot(cols2, w_ref[W2_OFF:W2_OFF + W2_ROWS, 0:C2],
                 preferred_element_type=jnp.float32)               # (B*P1, C2), row p*B+b

    # ---- MaxPool1d(2) fused with flatten, in registers ----
    # Pooled block q = max over positions 2q / 2q+1 (contiguous row pairs thanks to
    # position-major ordering); lane-concatenate the P2 (B, C2) blocks.
    # Kernel flatten order is (position, channel); torch's (channel, position) order
    # is absorbed by the pre-permuted w3 / gamma / beta in the wrapper.
    xf = jnp.concatenate(
        [jnp.maximum(h2[2 * q * B:(2 * q + 1) * B, :],
                     h2[(2 * q + 1) * B:(2 * q + 2) * B, :]) for q in range(P2)],
        axis=-1)                                                   # (B, FLAT)

    # ---- LayerNorm over 50 features (affine folded into w3 / b3 in the wrapper) ----
    mu = jnp.mean(xf, axis=-1, keepdims=True)
    var = jnp.mean((xf - mu) ** 2, axis=-1, keepdims=True)
    xn = (xf - mu) * jax.lax.rsqrt(var + LN_EPS)

    # ---- MLP: Linear(50 -> 100) + GELU + Linear(100 -> 6), biases folded ----
    ones_b = jnp.ones((B, 1), jnp.float32)
    h3 = _gelu(jnp.dot(jnp.concatenate([xn, ones_b], axis=-1),
                       w_ref[W3_OFF:W3_OFF + W3_ROWS, 0:H],
                       preferred_element_type=jnp.float32))        # (B, H)
    # Last matmul against all 128 slab lanes (zeros beyond OUT) -> lane-dense,
    # unmasked full-tile store; wrapper slices the first 6 columns.
    out_ref[...] = jnp.dot(jnp.concatenate([h3, ones_b], axis=-1),
                           w_ref[W4_OFF:W4_OFF + W4_ROWS, :],
                           preferred_element_type=jnp.float32)     # (B, 128)


def init_params(key):
    """Deterministic, PyTorch-default-style (uniform +-1/sqrt(fan_in)) init,
    stored in torch conventions (conv: (out, in, k); linear: (out, in))."""
    ks = jax.random.split(key, 8)

    def unif(k, shape, fan_in):
        bound = 1.0 / jnp.sqrt(jnp.float32(fan_in))
        return jax.random.uniform(k, shape, jnp.float32, -bound, bound)

    return dict(
        w1=unif(ks[0], (C1, C_IN, K1), C_IN * K1),
        b1=unif(ks[1], (C1,), C_IN * K1),
        w2=unif(ks[2], (C2, C1, K2), C1 * K2),
        b2=unif(ks[3], (C2,), C1 * K2),
        gamma=jnp.ones((FLAT,), jnp.float32),
        beta=jnp.zeros((FLAT,), jnp.float32),
        w3=unif(ks[4], (H, FLAT), FLAT),
        b3=unif(ks[5], (H,), FLAT),
        w4=unif(ks[6], (OUT, H), H),
        b4=unif(ks[7], (OUT,), H),
    )


def dual_cnn_forward(x, params):
    """x: (B, C_IN, OBS_RES) in PyTorch NCL convention.  Returns (motion, rot)."""
    assert x.shape == (B, C_IN, OBS_RES)
    x = x.astype(jnp.float32)

    # ---- conv1 im2col (wrapper-side layout plumbing, fused by XLA) ----
    x_nlc = jnp.transpose(x, (0, 2, 1))                              # (B, L1, C_IN)
    xp = jnp.pad(x_nlc, ((0, 0), (K1 // 2, K1 // 2), (0, 0)))        # (B, L1+2, C_IN)
    c1 = jnp.concatenate([xp[:, k:k + L1, :] for k in range(K1)], axis=-1)  # (B,L1,12)
    # Row order: [even positions | odd positions], each half position-major /
    # batch-minor, so pool1 is a contiguous-halves max and pool2/flatten become
    # static slices + lane concats inside the kernel.
    even = jnp.transpose(c1[:, 0::2, :], (1, 0, 2)).reshape(P1 * B, K1 * C_IN)
    odd = jnp.transpose(c1[:, 1::2, :], (1, 0, 2)).reshape(P1 * B, K1 * C_IN)
    cols1 = jnp.concatenate([even, odd], axis=0)                     # (2*B*P1, 12)
    cols1 = jnp.concatenate([cols1, jnp.ones((2 * P1 * B, 1), jnp.float32)],
                            axis=-1)                                 # (2*B*P1, 13)

    # ---- weight re-layouts + bias / LN-affine folds ----
    w1f = jnp.transpose(params["w1"], (2, 1, 0)).reshape(K1 * C_IN, C1)   # (12, 20)
    w2f = jnp.transpose(params["w2"], (2, 1, 0)).reshape(K2 * C1, C2)     # (100, 10)
    # torch flatten order is (channel, position); kernel order is (position, channel)
    gamma_k = params["gamma"].reshape(C2, P2).T.reshape(FLAT)
    beta_k = params["beta"].reshape(C2, P2).T.reshape(FLAT)
    w3f = jnp.transpose(params["w3"].reshape(H, C2, P2), (2, 1, 0)).reshape(FLAT, H)
    w3g = gamma_k[:, None] * w3f                   # fold LN scale into Linear1
    b3p = params["b3"] + beta_k @ w3f              # fold LN shift into Linear1 bias
    w4f = params["w4"].T                           # (100, 6)

    # ---- one (SLAB_ROWS, 128) f32 weight slab -> only 2 input DMAs total ----
    slab = jnp.zeros((SLAB_ROWS, LANES), jnp.float32)
    slab = slab.at[W1_OFF:W1_OFF + K1 * C_IN, :C1].set(w1f)
    slab = slab.at[W1_OFF + K1 * C_IN, :C1].set(params["b1"])
    slab = slab.at[W2_OFF:W2_OFF + K2 * C1, :C2].set(w2f)
    slab = slab.at[W2_OFF + K2 * C1, :C2].set(params["b2"])
    slab = slab.at[W3_OFF:W3_OFF + FLAT, :H].set(w3g)
    slab = slab.at[W3_OFF + FLAT, :H].set(b3p)
    slab = slab.at[W4_OFF:W4_OFF + H, :OUT].set(w4f)
    slab = slab.at[W4_OFF + H, :OUT].set(params["b4"])

    vmem = pl.BlockSpec(memory_space=pltpu.MemorySpace.VMEM)
    out = pl.pallas_call(
        dual_cnn_kernel,
        out_shape=jax.ShapeDtypeStruct((B, LANES), jnp.float32),
        in_specs=[vmem, vmem],
        out_specs=vmem,
    )(cols1, slab)

    return out[:, :3], out[:, 3:OUT]


def _reference_forward(x, params):
    """Plain-JAX emulation of the PyTorch module (torch layouts / flatten order)."""
    hp = jax.lax.Precision.HIGHEST
    x = x.astype(jnp.float32)                                    # (B, 4, 20)
    xp = jnp.pad(x, ((0, 0), (0, 0), (1, 1)))
    h1 = sum(jnp.einsum("bcl,oc->bol", xp[:, :, k:k + L1], params["w1"][:, :, k],
                        precision=hp) for k in range(K1)) + params["b1"][None, :, None]
    p1 = jnp.maximum(h1[:, :, 0::2], h1[:, :, 1::2])
    g1 = 0.5 * p1 * (1.0 + jax.lax.erf(p1 * _INV_SQRT2))
    gp = jnp.pad(g1, ((0, 0), (0, 0), (2, 2)))
    h2 = sum(jnp.einsum("bcl,oc->bol", gp[:, :, k:k + L2], params["w2"][:, :, k],
                        precision=hp) for k in range(K2)) + params["b2"][None, :, None]
    p2 = jnp.maximum(h2[:, :, 0::2], h2[:, :, 1::2])             # (B, C2, P2)
    f = p2.reshape(x.shape[0], FLAT)                             # torch flatten order
    mu = f.mean(-1, keepdims=True)
    var = ((f - mu) ** 2).mean(-1, keepdims=True)
    xn = (f - mu) / jnp.sqrt(var + LN_EPS) * params["gamma"] + params["beta"]
    h3 = jnp.dot(xn, params["w3"].T, precision=hp) + params["b3"]
    h3 = 0.5 * h3 * (1.0 + jax.lax.erf(h3 * _INV_SQRT2))
    out = jnp.dot(h3, params["w4"].T, precision=hp) + params["b4"]
    return out[:, :3], out[:, 3:]


if __name__ == "__main__":
    key = jax.random.PRNGKey(0)
    pkey, xkey = jax.random.split(key)
    params = init_params(pkey)
    x = jax.random.normal(xkey, (B, C_IN, OBS_RES), dtype=jnp.float32)

    motion, rot = jax.jit(dual_cnn_forward)(x, params)
    jax.block_until_ready((motion, rot))
    assert motion.shape == (B, 3) and rot.shape == (B, 3)

    # sanity-check numerics against the plain-JAX reference of the torch module
    ref_motion, ref_rot = _reference_forward(x, params)
    assert jnp.allclose(motion, ref_motion, atol=1e-3, rtol=1e-3)
    assert jnp.allclose(rot, ref_rot, atol=1e-3, rtol=1e-3)

    print("KERNEL_OK")
</pallas_src>

<mosaic_0001>
module attributes {stable_mosaic.version = 11 : i64} {
  func.func @dual_cnn_kernel(%arg0: memref<40x13xf32, #tpu.memory_space<vmem>>, %arg1: memref<280x128xf32, #tpu.memory_space<vmem>>, %arg2: memref<2x128xf32, #tpu.memory_space<vmem>>) attributes {dimension_semantics = [], scalar_prefetch = 0 : i64, scratch_operands = 0 : i64, tpu.core_type = #tpu.core_type<tc>} {
    %c0 = arith.constant 0 : index
    %c0_0 = arith.constant 0 : index
    %0 = vector.load %arg0[%c0, %c0_0] : memref<40x13xf32, #tpu.memory_space<vmem>>, vector<40x13xf32>
    %c0_1 = arith.constant 0 : index
    %c0_2 = arith.constant 0 : index
    %1 = vector.load %arg1[%c0_1, %c0_2] : memref<280x128xf32, #tpu.memory_space<vmem>>, vector<13x20xf32>
    %cst = arith.constant dense<0.000000e+00> : vector<40x20xf32>
    %2 = tpu.matmul %0, %1, %cst {dimension_numbers = #tpu.dot_dimension_numbers<[1], [0], [0], [1], [0, 0, 1, 1], [], []>} : vector<40x13xf32>, vector<13x20xf32>, vector<40x20xf32> -> vector<40x20xf32>
    %3 = vector.extract_strided_slice %2 {offsets = [0, 0], sizes = [20, 20], strides = [1, 1]} : vector<40x20xf32> to vector<20x20xf32>
    %4 = vector.extract_strided_slice %2 {offsets = [20, 0], sizes = [20, 20], strides = [1, 1]} : vector<40x20xf32> to vector<20x20xf32>
    %5 = arith.maximumf %3, %4 : vector<20x20xf32>
    %cst_3 = arith.constant 5.000000e-01 : f32
    %6 = vector.broadcast %cst_3 : f32 to vector<20x20xf32>
    %7 = arith.mulf %6, %5 : vector<20x20xf32>
    %cst_4 = arith.constant 0.707106769 : f32
    %8 = vector.broadcast %cst_4 : f32 to vector<20x20xf32>
    %9 = arith.mulf %5, %8 : vector<20x20xf32>
    %10 = math.erf %9 : vector<20x20xf32>
    %cst_5 = arith.constant 1.000000e+00 : f32
    %11 = vector.broadcast %cst_5 : f32 to vector<20x20xf32>
    %12 = arith.addf %11, %10 : vector<20x20xf32>
    %13 = arith.mulf %7, %12 : vector<20x20xf32>
    %cst_6 = arith.constant 0.000000e+00 : f32
    %14 = vector.broadcast %cst_6 : f32 to vector<4x20xf32>
    %15 = tpu.concatenate %14, %13, %14 in 0 : vector<4x20xf32>, vector<20x20xf32>, vector<4x20xf32> -> vector<28x20xf32>
    %cst_7 = arith.constant 1.000000e+00 : f32
    %16 = vector.broadcast %cst_7 : f32 to vector<20x1xf32>
    %17 = vector.extract_strided_slice %15 {offsets = [0, 0], sizes = [20, 20], strides = [1, 1]} : vector<28x20xf32> to vector<20x20xf32>
    %18 = vector.extract_strided_slice %15 {offsets = [2, 0], sizes = [20, 20], strides = [1, 1]} : vector<28x20xf32> to vector<20x20xf32>
    %19 = vector.extract_strided_slice %15 {offsets = [4, 0], sizes = [20, 20], strides = [1, 1]} : vector<28x20xf32> to vector<20x20xf32>
    %20 = vector.extract_strided_slice %15 {offsets = [6, 0], sizes = [20, 20], strides = [1, 1]} : vector<28x20xf32> to vector<20x20xf32>
    %21 = vector.extract_strided_slice %15 {offsets = [8, 0], sizes = [20, 20], strides = [1, 1]} : vector<28x20xf32> to vector<20x20xf32>
    %22 = tpu.concatenate %17, %18, %19, %20, %21, %16 in 1 : vector<20x20xf32>, vector<20x20xf32>, vector<20x20xf32>, vector<20x20xf32>, vector<20x20xf32>, vector<20x1xf32> -> vector<20x101xf32>
    %c16 = arith.constant 16 : index
    %c0_8 = arith.constant 0 : index
    %23 = vector.load %arg1[%c16, %c0_8] : memref<280x128xf32, #tpu.memory_space<vmem>>, vector<101x10xf32>
    %cst_9 = arith.constant dense<0.000000e+00> : vector<20x10xf32>
    %24 = tpu.matmul %22, %23, %cst_9 {dimension_numbers = #tpu.dot_dimension_numbers<[1], [0], [0], [1], [0, 0, 1, 1], [], []>} : vector<20x101xf32>, vector<101x10xf32>, vector<20x10xf32> -> vector<20x10xf32>
    %25 = vector.extract_strided_slice %24 {offsets = [0, 0], sizes = [2, 10], strides = [1, 1]} : vector<20x10xf32> to vector<2x10xf32>
    %26 = vector.extract_strided_slice %24 {offsets = [2, 0], sizes = [2, 10], strides = [1, 1]} : vector<20x10xf32> to vector<2x10xf32>
    %27 = arith.maximumf %25, %26 : vector<2x10xf32>
    %28 = vector.extract_strided_slice %24 {offsets = [4, 0], sizes = [2, 10], strides = [1, 1]} : vector<20x10xf32> to vector<2x10xf32>
    %29 = vector.extract_strided_slice %24 {offsets = [6, 0], sizes = [2, 10], strides = [1, 1]} : vector<20x10xf32> to vector<2x10xf32>
    %30 = arith.maximumf %28, %29 : vector<2x10xf32>
    %31 = vector.extract_strided_slice %24 {offsets = [8, 0], sizes = [2, 10], strides = [1, 1]} : vector<20x10xf32> to vector<2x10xf32>
    %32 = vector.extract_strided_slice %24 {offsets = [10, 0], sizes = [2, 10], strides = [1, 1]} : vector<20x10xf32> to vector<2x10xf32>
    %33 = arith.maximumf %31, %32 : vector<2x10xf32>
    %34 = vector.extract_strided_slice %24 {offsets = [12, 0], sizes = [2, 10], strides = [1, 1]} : vector<20x10xf32> to vector<2x10xf32>
    %35 = vector.extract_strided_slice %24 {offsets = [14, 0], sizes = [2, 10], strides = [1, 1]} : vector<20x10xf32> to vector<2x10xf32>
    %36 = arith.maximumf %34, %35 : vector<2x10xf32>
    %37 = vector.extract_strided_slice %24 {offsets = [16, 0], sizes = [2, 10], strides = [1, 1]} : vector<20x10xf32> to vector<2x10xf32>
    %38 = vector.extract_strided_slice %24 {offsets = [18, 0], sizes = [2, 10], strides = [1, 1]} : vector<20x10xf32> to vector<2x10xf32>
    %39 = arith.maximumf %37, %38 : vector<2x10xf32>
    %40 = tpu.concatenate %27, %30, %33, %36, %39 in 1 : vector<2x10xf32>, vector<2x10xf32>, vector<2x10xf32>, vector<2x10xf32>, vector<2x10xf32> -> vector<2x50xf32>
    %cst_10 = arith.constant dense<0.000000e+00> : vector<2xf32>
    %41 = vector.multi_reduction <add>, %40, %cst_10 [1] : vector<2x50xf32> to vector<2xf32>
    %42 = vector.shape_cast %41 : vector<2xf32> to vector<2x1xf32>
    %cst_11 = arith.constant 5.000000e+01 : f32
    %43 = vector.broadcast %cst_11 : f32 to vector<2x1xf32>
    %44 = arith.divf %42, %43 : vector<2x1xf32>
    %45 = vector.broadcast %44 : vector<2x1xf32> to vector<2x50xf32>
    %46 = arith.subf %40, %45 : vector<2x50xf32>
    %47 = arith.mulf %46, %46 : vector<2x50xf32>
    %cst_12 = arith.constant dense<0.000000e+00> : vector<2xf32>
    %48 = vector.multi_reduction <add>, %47, %cst_12 [1] : vector<2x50xf32> to vector<2xf32>
    %49 = vector.shape_cast %48 : vector<2xf32> to vector<2x1xf32>
    %cst_13 = arith.constant 5.000000e+01 : f32
    %50 = vector.broadcast %cst_13 : f32 to vector<2x1xf32>
    %51 = arith.divf %49, %50 : vector<2x1xf32>
    %52 = vector.broadcast %44 : vector<2x1xf32> to vector<2x50xf32>
    %53 = arith.subf %40, %52 : vector<2x50xf32>
    %cst_14 = arith.constant 9.99999974E-6 : f32
    %54 = vector.broadcast %cst_14 : f32 to vector<2x1xf32>
    %55 = arith.addf %51, %54 : vector<2x1xf32>
    %56 = math.rsqrt %55 : vector<2x1xf32>
    %57 = vector.broadcast %56 : vector<2x1xf32> to vector<2x50xf32>
    %58 = arith.mulf %53, %57 : vector<2x50xf32>
    %cst_15 = arith.constant 1.000000e+00 : f32
    %59 = vector.broadcast %cst_15 : f32 to vector<2x1xf32>
    %60 = tpu.concatenate %58, %59 in 1 : vector<2x50xf32>, vector<2x1xf32> -> vector<2x51xf32>
    %c120 = arith.constant 120 : index
    %c0_16 = arith.constant 0 : index
    %61 = vector.load %arg1[%c120, %c0_16] : memref<280x128xf32, #tpu.memory_space<vmem>>, vector<51x100xf32>
    %cst_17 = arith.constant dense<0.000000e+00> : vector<2x100xf32>
    %62 = tpu.matmul %60, %61, %cst_17 {dimension_numbers = #tpu.dot_dimension_numbers<[1], [0], [0], [1], [0, 0, 1, 1], [], []>} : vector<2x51xf32>, vector<51x100xf32>, vector<2x100xf32> -> vector<2x100xf32>
    %cst_18 = arith.constant 5.000000e-01 : f32
    %63 = vector.broadcast %cst_18 : f32 to vector<2x100xf32>
    %64 = arith.mulf %63, %62 : vector<2x100xf32>
    %cst_19 = arith.constant 0.707106769 : f32
    %65 = vector.broadcast %cst_19 : f32 to vector<2x100xf32>
    %66 = arith.mulf %62, %65 : vector<2x100xf32>
    %67 = math.erf %66 : vector<2x100xf32>
    %cst_20 = arith.constant 1.000000e+00 : f32
    %68 = vector.broadcast %cst_20 : f32 to vector<2x100xf32>
    %69 = arith.addf %68, %67 : vector<2x100xf32>
    %70 = arith.mulf %64, %69 : vector<2x100xf32>
    %71 = tpu.concatenate %70, %59 in 1 : vector<2x100xf32>, vector<2x1xf32> -> vector<2x101xf32>
    %c176 = arith.constant 176 : index
    %c0_21 = arith.constant 0 : index
    %72 = vector.load %arg1[%c176, %c0_21] : memref<280x128xf32, #tpu.memory_space<vmem>>, vector<101x128xf32>
    %cst_22 = arith.constant dense<0.000000e+00> : vector<2x128xf32>
    %73 = tpu.matmul %71, %72, %cst_22 {dimension_numbers = #tpu.dot_dimension_numbers<[1], [0], [0], [1], [0, 0, 1, 1], [], []>} : vector<2x101xf32>, vector<101x128xf32>, vector<2x128xf32> -> vector<2x128xf32>
    %c0_23 = arith.constant 0 : index
    %c0_24 = arith.constant 0 : index
    %74 = vector.load %arg2[%c0_23, %c0_24] : memref<2x128xf32, #tpu.memory_space<vmem>>, vector<2x128xf32>
    tpu.vector_store %arg2[%c0_23, %c0_24], %73 {strides = array<i32>} : memref<2x128xf32, #tpu.memory_space<vmem>>, vector<2x128xf32>,
    return
  }
}

</mosaic_0001>

<llo_original>
// kernel: dual_cnn_forward.1
$region0: #{dual_cnn_forward.1}
  #allocation0 [shape = 'u32[]', space=smem, size = 0x4, offset = 0x4, fixed_abs, tag = 'smem constant byte address 0x4 - core index']
  #allocation1 [shape = 'u32[144,128]{1,0:T(1,128)}', space=vmem, size = 0x12000, scoped, tag = 'internal scratch']
  %s0 = inlined_call_operand.vmem [shape: f32[40,13], index: 0, kind: input, shape index: {}]
  %s1 = inlined_call_operand.vmem [shape: f32[280,128], index: 1, kind: input, shape index: {}]
  %s2 = inlined_call_operand.vmem [shape: f32[2,128], index: 2, kind: output, shape index: {}]
  %s3 = sld [smem:[#allocation0]]
  $region18: #{dual_cnn_forward.1} parent=0
    _
  %s5 = ssub.s32 1, %s3
  %s6 = scalar_select 0, %s5, %s3
  // Predicated region
  $region2: #{dual_cnn_forward.1} parent=0 // pred_check
    _
  $region3: #{dual_cnn_forward.1} parent=0 // pred_check_branch
    %8 = sbr.rel (0) target = $region5
  $region4: #{dual_cnn_forward.1} parent=0 // pred_region
    _
  $region5: #{dual_cnn_forward.1} parent=0 // pred_fallthru
    _
  // Predicated region
  $region6: #{dual_cnn_forward.1} parent=0 // pred_check
    _
  $region7: #{dual_cnn_forward.1} parent=0 // pred_check_branch
    %10 = sbr.rel (0) target = $region9
  $region8: #{dual_cnn_forward.1} parent=0 // pred_region
    _
  $region9: #{dual_cnn_forward.1} parent=0 // pred_fallthru
    _
  %v11 = vld [vmem:[%s0] sm:$0xff]
  %v12 = vld [vmem:[%s0 + $0x8] sm:$0xff]
  %v13 = vld [vmem:[%s0 + $0x10] sm:$0xff]
  %v14 = vld [vmem:[%s0 + $0x18] sm:$0xff]
  %v15 = vld [vmem:[%s0 + $0x20] sm:$0xff]
  %v16 = vld [vmem:[%s1] sm:$0xff]
  %v17 = vld [vmem:[%s1 + $0x8] sm:$0x1f]
  %vm18 = vcmask 105472
  %v20 = vsel %vm18, %v11, 0
  %v23 = vsel %vm18, %v12, 0
  %v26 = vsel %vm18, %v13, 0
  %v29 = vsel %vm18, %v14, 0
  %v32 = vsel %vm18, %v15, 0
  %vm34 = vcmask 1044480
  %v36 = vsel %vm34, %v17, 0
  %38 = vmatprep.subr.mxu0 0.0
  %39 = vmatpush1.msra.mxu0 0.0
  %40 = vmatprep.subr.mxu0 0.0
  %41 = vmatpush1.msra.mxu0 0.0
  %42 = vmatprep.subr.mxu0 0.0
  %43 = vmatpush1.msra.mxu0 0.0
  %44 = vmatprep.subr.mxu0 0.0
  %45 = vmatpush1.msra.mxu0 0.0
  %46 = vmatprep.subr.mxu0 0.0
  %47 = vmatpush1.msra.mxu0 0.0
  %48 = vmatprep.subr.mxu0 0.0
  %49 = vmatpush1.msra.mxu0 0.0
  %50 = vmatprep.subr.mxu0 0.0
  %51 = vmatpush1.msra.mxu0 0.0
  %52 = vmatprep.subr.mxu0 0.0
  %53 = vmatpush1.msra.mxu0 0.0
  %54 = vmatprep.subr.mxu0 0.0
  %55 = vmatpush1.msra.mxu0 0.0
  %56 = vmatprep.subr.mxu0 0.0
  %57 = vmatpush1.msra.mxu0 0.0
  %58 = vmatprep.subr.mxu0 0.0
  %59 = vmatpush1.msra.mxu0 0.0
  %60 = vmatprep.subr.mxu0 0.0
  %61 = vmatpush1.msra.mxu0 0.0
  %62 = vmatprep.subr.mxu0 0.0
  %63 = vmatpush1.msra.mxu0 0.0
  %64 = vmatprep.subr.mxu0 0.0
  %65 = vmatpush1.msra.mxu0 0.0
  %66 = vmatprep.subr.mxu0 0.0
  %67 = vmatpush1.msra.mxu0 %v36
  %68 = vmatprep.subr.mxu0 0.0
  %69 = vmatpush1.msra.mxu0 %v16
  %70 = vmatprep.subr.mxu0 0.0
  %71 = vmatpush2.msra.mxu0 0.0
  %72 = vmatprep.subr.mxu0 0.0
  %73 = vmatpush2.msra.mxu0 0.0
  %74 = vmatprep.subr.mxu0 0.0
  %75 = vmatpush2.msra.mxu0 0.0
  %76 = vmatprep.subr.mxu0 0.0
  %77 = vmatpush2.msra.mxu0 0.0
  %78 = vmatprep.subr.mxu0 0.0
  %79 = vmatpush2.msra.mxu0 0.0
  %80 = vmatprep.subr.mxu0 0.0
  %81 = vmatpush2.msra.mxu0 0.0
  %82 = vmatprep.subr.mxu0 0.0
  %83 = vmatpush2.msra.mxu0 0.0
  %84 = vmatprep.subr.mxu0 0.0
  %85 = vmatpush2.msra.mxu0 0.0
  %86 = vmatprep.subr.mxu0 0.0
  %87 = vmatpush2.msra.mxu0 0.0
  %88 = vmatprep.subr.mxu0 0.0
  %89 = vmatpush2.msra.mxu0 0.0
  %90 = vmatprep.subr.mxu0 0.0
  %91 = vmatpush2.msra.mxu0 0.0
  %92 = vmatprep.subr.mxu0 0.0
  %93 = vmatpush2.msra.mxu0 0.0
  %94 = vmatprep.subr.mxu0 0.0
  %95 = vmatpush2.msra.mxu0 0.0
  %96 = vmatprep.subr.mxu0 0.0
  %97 = vmatpush2.msra.mxu0 0.0
  %98 = vmatprep.subr.mxu0 0.0
  %99 = vmatpush2.msra.mxu0 0.0
  %100 = vmatprep.subr.mxu0 0.0
  %101 = vmatpush2.msra.mxu0 0.0
  %102 = vmatprep.mubr.f32.mxu0 0.0
  %103 = vmatmul.mubr.f32.gmra.mxu0 %v20
  %v104 = vpop.f32.mrf.mxu0
  %v105 = vadd.f32 0.0, %v104
  %v106 = vpop.f32.mrf.mxu0
  %107 = vmatprep.mubr.f32.mxu0 0.0
  %108 = vmatmul.mubr.f32.gmra.mxu0 %v23
  %v109 = vpop.f32.mrf.mxu0
  %v110 = vadd.f32 0.0, %v109
  %v111 = vpop.f32.mrf.mxu0
  %112 = vmatprep.mubr.f32.mxu0 0.0
  %113 = vmatmul.mubr.f32.gmra.mxu0 %v26
  %v114 = vpop.f32.mrf.mxu0
  %v115 = vadd.f32 0.0, %v114
  %v116 = vpop.f32.mrf.mxu0
  %117 = vmatprep.mubr.f32.mxu0 0.0
  %118 = vmatmul.mubr.f32.gmra.mxu0 %v29
  %v119 = vpop.f32.mrf.mxu0
  %v120 = vadd.f32 0.0, %v119
  %v121 = vpop.f32.mrf.mxu0
  %122 = vmatprep.mubr.f32.mxu0 0.0
  %123 = vmatmul.mubr.f32.gmra.mxu0 %v32
  %v124 = vpop.f32.mrf.mxu0
  %v125 = vadd.f32 0.0, %v124
  %v126 = vpop.f32.mrf.mxu0
  %127 = vdwg.mxu0
  %vm131 = vcmask 1043456
  %v132 = vrot.slane %v115, 4
  %v133 = vrot.slane %v120, 4
  %v134 = vsel %vm131, %v132, %v133
  %v135 = vrot.slane %v125, 4
  %v136 = vsel %vm131, %v133, %v135
  %v140 = vmax.f32 %v105, %v134
  %v141 = vmax.f32 %v110, %v136
  %v142 = vmax.f32 %v115, %v135
  %v143 = vmul.f32 %v140, 0.5
  %v144 = vmul.f32 %v141, 0.5
  %v145 = vmul.f32 %v142, 0.5
  %v146 = vmul.f32 %v140, 0.70710677
  %v147 = vmul.f32 %v141, 0.70710677
  %v148 = vmul.f32 %v142, 0.70710677
  %v149 = verf.f32.pop %v146
  %v150 = verf.f32.pop %v147
  %v151 = verf.f32.pop %v148
  %v152 = vadd.f32 %v149, 1.0
  %v153 = vadd.f32 %v150, 1.0
  %v154 = vadd.f32 %v151, 1.0
  %v155 = vmul.f32 %v143, %v152
  %v156 = vmul.f32 %v144, %v153
  %v157 = vmul.f32 %v145, %v154
  %v161 = vrot.slane %v155, 4
  %v162 = vrot.slane %v156, 4
  %v163 = vsel %vm131, %v161, %v162
  %v164 = vrot.slane %v157, 4
  %v165 = vsel %vm131, %v162, %v164
  %v169 = vsel %vm131, 0.0, %v161
  %vm171 = vcmask 1045504
  %v172 = vrot.slane %v169, 2
  %v173 = vrot.slane %v163, 2
  %v174 = vsel %vm171, %v172, %v173
  %v175 = vrot.slane %v165, 2
  %v176 = vsel %vm171, %v173, %v175
  %177 = vrot.lane.b32.xlu0 %v174, 20
  %v178 = vpop.permute.xlu0 %177
  %179 = vrot.lane.b32.xlu0 %v176, 20
  %v180 = vpop.permute.xlu0 %179
  %181 = vrot.lane.b32.xlu0 %v175, 20
  %v182 = vpop.permute.xlu0 %181
  %v186 = vrot.slane %v169, 4
  %v187 = vrot.slane %v163, 4
  %v188 = vsel %vm131, %v186, %v187
  %v189 = vrot.slane %v165, 4
  %v190 = vsel %vm131, %v187, %v189
  %191 = vrot.lane.b32.xlu0 %v188, 40
  %v192 = vpop.permute.xlu0 %191
  %193 = vrot.lane.b32.xlu0 %v190, 40
  %v194 = vpop.permute.xlu0 %193
  %195 = vrot.lane.b32.xlu0 %v189, 40
  %v196 = vpop.permute.xlu0 %195
  %vm201 = vcmask 1041408
  %v202 = vrot.slane %v169, 6
  %v203 = vrot.slane %v163, 6
  %v204 = vsel %vm201, %v202, %v203
  %v205 = vrot.slane %v165, 6
  %v206 = vsel %vm201, %v203, %v205
  %v207 = vrot.slane 0.0, 6
  %v208 = vsel %vm201, %v205, %v207
  %209 = vrot.lane.b32.xlu0 %v204, 60
  %v210 = vpop.permute.xlu0 %209
  %211 = vrot.lane.b32.xlu0 %v206, 60
  %v212 = vpop.permute.xlu0 %211
  %213 = vrot.lane.b32.xlu0 %v208, 60
  %v214 = vpop.permute.xlu0 %213
  %218 = vrot.lane.b32.xlu0 %v163, 80
  %v219 = vpop.permute.xlu0 %218
  %220 = vrot.lane.b32.xlu0 %v165, 80
  %v221 = vpop.permute.xlu0 %220
  %222 = vrot.lane.b32.xlu0 0.0, 80
  %v223 = vpop.permute.xlu0 %222
  %vm227 = vcmask 162816
  %v228 = vsel %vm227, %v169, %v178
  %v229 = vsel %vm227, %v163, %v180
  %v230 = vsel %vm227, %v165, %v182
  %vm231 = vcmask 326656
  %v232 = vsel %vm231, %v228, %v192
  %v233 = vsel %vm231, %v229, %v194
  %v234 = vsel %vm231, %v230, %v196
  %vm235 = vcmask 490496
  %v236 = vsel %vm235, %v232, %v210
  %v237 = vsel %vm235, %v233, %v212
  %v238 = vsel %vm235, %v234, %v214
  %vm239 = vcmask 654336
  %v240 = vsel %vm239, %v236, %v219
  %v241 = vsel %vm239, %v237, %v221
  %v242 = vsel %vm239, %v238, %v223
  %vm243 = vcmask 818176
  %v244 = vsel %vm243, %v240, 1.0
  %v245 = vsel %vm243, %v241, 1.0
  %v246 = vsel %vm243, %v242, 1.0
  %v247 = vld [vmem:[%s1 + $0x10] sm:$0xff]
  %v248 = vld [vmem:[%s1 + $0x18] sm:$0xff]
  %v249 = vld [vmem:[%s1 + $0x20] sm:$0xff]
  %v250 = vld [vmem:[%s1 + $0x28] sm:$0xff]
  %v251 = vld [vmem:[%s1 + $0x30] sm:$0xff]
  %v252 = vld [vmem:[%s1 + $0x38] sm:$0xff]
  %v253 = vld [vmem:[%s1 + $0x40] sm:$0xff]
  %v254 = vld [vmem:[%s1 + $0x48] sm:$0xff]
  %v255 = vld [vmem:[%s1 + $0x50] sm:$0xff]
  %v256 = vld [vmem:[%s1 + $0x58] sm:$0xff]
  %v257 = vld [vmem:[%s1 + $0x60] sm:$0xff]
  %v258 = vld [vmem:[%s1 + $0x68] sm:$0xff]
  %v259 = vld [vmem:[%s1 + $0x70] sm:$0x1f]
  %vm260 = vcmask 826368
  %v262 = vsel %vm260, %v244, 0
  %v265 = vsel %vm260, %v245, 0
  %v268 = vsel %vm260, %v246, 0
  %v271 = vsel %vm34, %v259, 0
  %273 = vmatprep.subr.mxu0 0.0
  %274 = vmatpush1.msra.mxu0 0.0
  %275 = vmatprep.subr.mxu0 0.0
  %276 = vmatpush1.msra.mxu0 0.0
  %277 = vmatprep.subr.mxu0 0.0
  %278 = vmatpush1.msra.mxu0 0.0
  %279 = vmatprep.subr.mxu0 0.0
  %280 = vmatpush1.msra.mxu0 %v271
  %281 = vmatprep.subr.mxu0 0.0
  %282 = vmatpush1.msra.mxu0 %v258
  %283 = vmatprep.subr.mxu0 0.0
  %284 = vmatpush1.msra.mxu0 %v257
  %285 = vmatprep.subr.mxu0 0.0
  %286 = vmatpush1.msra.mxu0 %v256
  %287 = vmatprep.subr.mxu0 0.0
  %288 = vmatpush1.msra.mxu0 %v255
  %289 = vmatprep.subr.mxu0 0.0
  %290 = vmatpush1.msra.mxu0 %v254
  %291 = vmatprep.subr.mxu0 0.0
  %292 = vmatpush1.msra.mxu0 %v253
  %293 = vmatprep.subr.mxu0 0.0
  %294 = vmatpush1.msra.mxu0 %v252
  %295 = vmatprep.subr.mxu0 0.0
  %296 = vmatpush1.msra.mxu0 %v251
  %297 = vmatprep.subr.mxu0 0.0
  %298 = vmatpush1.msra.mxu0 %v250
  %299 = vmatprep.subr.mxu0 0.0
  %300 = vmatpush1.msra.mxu0 %v249
  %301 = vmatprep.subr.mxu0 0.0
  %302 = vmatpush1.msra.mxu0 %v248
  %303 = vmatprep.subr.mxu0 0.0
  %304 = vmatpush1.msra.mxu0 %v247
  %305 = vmatprep.subr.mxu0 0.0
  %306 = vmatpush2.msra.mxu0 0.0
  %307 = vmatprep.subr.mxu0 0.0
  %308 = vmatpush2.msra.mxu0 0.0
  %309 = vmatprep.subr.mxu0 0.0
  %310 = vmatpush2.msra.mxu0 0.0
  %311 = vmatprep.subr.mxu0 0.0
  %312 = vmatpush2.msra.mxu0 0.0
  %313 = vmatprep.subr.mxu0 0.0
  %314 = vmatpush2.msra.mxu0 0.0
  %315 = vmatprep.subr.mxu0 0.0
  %316 = vmatpush2.msra.mxu0 0.0
  %317 = vmatprep.subr.mxu0 0.0
  %318 = vmatpush2.msra.mxu0 0.0
  %319 = vmatprep.subr.mxu0 0.0
  %320 = vmatpush2.msra.mxu0 0.0
  %321 = vmatprep.subr.mxu0 0.0
  %322 = vmatpush2.msra.mxu0 0.0
  %323 = vmatprep.subr.mxu0 0.0
  %324 = vmatpush2.msra.mxu0 0.0
  %325 = vmatprep.subr.mxu0 0.0
  %326 = vmatpush2.msra.mxu0 0.0
  %327 = vmatprep.subr.mxu0 0.0
  %328 = vmatpush2.msra.mxu0 0.0
  %329 = vmatprep.subr.mxu0 0.0
  %330 = vmatpush2.msra.mxu0 0.0
  %331 = vmatprep.subr.mxu0 0.0
  %332 = vmatpush2.msra.mxu0 0.0
  %333 = vmatprep.subr.mxu0 0.0
  %334 = vmatpush2.msra.mxu0 0.0
  %335 = vmatprep.subr.mxu0 0.0
  %336 = vmatpush2.msra.mxu0 0.0
  %337 = vmatprep.mubr.f32.mxu0 0.0
  %338 = vmatmul.mubr.f32.gmra.mxu0 %v262
  %v339 = vpop.f32.mrf.mxu0
  %v340 = vadd.f32 0.0, %v339
  %v341 = vpop.f32.mrf.mxu0
  %342 = vmatprep.mubr.f32.mxu0 0.0
  %343 = vmatmul.mubr.f32.gmra.mxu0 %v265
  %v344 = vpop.f32.mrf.mxu0
  %v345 = vadd.f32 0.0, %v344
  %v346 = vpop.f32.mrf.mxu0
  %347 = vmatprep.mubr.f32.mxu0 0.0
  %348 = vmatmul.mubr.f32.gmra.mxu0 %v268
  %v349 = vpop.f32.mrf.mxu0
  %v350 = vadd.f32 0.0, %v349
  %v351 = vpop.f32.mrf.mxu0
  %352 = vdwg.mxu0
  %v354 = vrot.slane %v340, 2
  %v356 = vmax.f32 %v340, %v354
  %v358 = vrot.slane %v345, 2
  %v360 = vmax.f32 %v345, %v358
  %v362 = vrot.slane %v350, 2
  %v364 = vmax.f32 %v350, %v362
  %v366 = vrot.slane %v356, 4
  %367 = vrot.lane.b32.xlu0 %v366, 10
  %v368 = vpop.permute.xlu0 %367
  %371 = vrot.lane.b32.xlu0 %v360, 20
  %v372 = vpop.permute.xlu0 %371
  %v374 = vrot.slane %v360, 4
  %375 = vrot.lane.b32.xlu0 %v374, 30
  %v376 = vpop.permute.xlu0 %375
  %379 = vrot.lane.b32.xlu0 %v364, 40
  %v380 = vpop.permute.xlu0 %379
  %vm382 = vcmask 80896
  %v383 = vsel %vm382, %v356, %v368
  %v384 = vsel %vm227, %v383, %v372
  %vm385 = vcmask 244736
  %v386 = vsel %vm385, %v384, %v376
  %v387 = vsel %vm231, %v386, %v380
  %vm388 = vcmask 402432
  %v389 = vsel %vm388, %v387, 0.0
  %390 = vadd.xlane.f32.xlu0 %v389
  %v391 = vpop.xlane.xlu0 %390
  %v392 = vrcp.pop 50.0
  %v393 = vmul.f32 %v391, %v392
  %v394 = vsub.f32 %v387, %v393
  %v395 = vmul.f32 %v394, %v394
  %v396 = vsel %vm388, %v395, 0.0
  %397 = vadd.xlane.f32.xlu0 %v396
  %v398 = vpop.xlane.xlu0 %397
  %v399 = vmul.f32 %v398, %v392
  %v400 = vadd.f32 %v399, 1e-05
  %v401 = vrsqrt.pop %v400
  %v402 = vmul.f32 %v394, %v401
  %vm403 = vcmask 408576
  %v404 = vsel %vm403, %v402, 1.0
  %v405 = vld [vmem:[%s1 + $0x78] sm:$0xff]
  %v406 = vld [vmem:[%s1 + $0x80] sm:$0xff]
  %v407 = vld [vmem:[%s1 + $0x88] sm:$0xff]
  %v408 = vld [vmem:[%s1 + $0x90] sm:$0xff]
  %v409 = vld [vmem:[%s1 + $0x98] sm:$0xff]
  %v410 = vld [vmem:[%s1 + $0xa0] sm:$0xff]
  %v411 = vld [vmem:[%s1 + $0xa8] sm:$0x7]
  %vm412 = vcmask 416768
  %v414 = vsel %vm412, %v404, 0
  %vm416 = vcmask 1042432
  %v418 = vsel %vm416, %v411, 0
  %420 = vmatprep.subr.mxu0 0.0
  %421 = vmatpush1.msra.mxu0 0.0
  %422 = vmatprep.subr.mxu0 0.0
  %423 = vmatpush1.msra.mxu0 0.0
  %424 = vmatprep.subr.mxu0 0.0
  %425 = vmatpush1.msra.mxu0 0.0
  %426 = vmatprep.subr.mxu0 0.0
  %427 = vmatpush1.msra.mxu0 0.0
  %428 = vmatprep.subr.mxu0 0.0
  %429 = vmatpush1.msra.mxu0 0.0
  %430 = vmatprep.subr.mxu0 0.0
  %431 = vmatpush1.msra.mxu0 0.0
  %432 = vmatprep.subr.mxu0 0.0
  %433 = vmatpush1.msra.mxu0 0.0
  %434 = vmatprep.subr.mxu0 0.0
  %435 = vmatpush1.msra.mxu0 0.0
  %436 = vmatprep.subr.mxu0 0.0
  %437 = vmatpush1.msra.mxu0 0.0
  %438 = vmatprep.subr.mxu0 0.0
  %439 = vmatpush1.msra.mxu0 %v418
  %440 = vmatprep.subr.mxu0 0.0
  %441 = vmatpush1.msra.mxu0 %v410
  %442 = vmatprep.subr.mxu0 0.0
  %443 = vmatpush1.msra.mxu0 %v409
  %444 = vmatprep.subr.mxu0 0.0
  %445 = vmatpush1.msra.mxu0 %v408
  %446 = vmatprep.subr.mxu0 0.0
  %447 = vmatpush1.msra.mxu0 %v407
  %448 = vmatprep.subr.mxu0 0.0
  %449 = vmatpush1.msra.mxu0 %v406
  %450 = vmatprep.subr.mxu0 0.0
  %451 = vmatpush1.msra.mxu0 %v405
  %452 = vmatprep.subr.mxu0 0.0
  %453 = vmatpush2.msra.mxu0 0.0
  %454 = vmatprep.subr.mxu0 0.0
  %455 = vmatpush2.msra.mxu0 0.0
  %456 = vmatprep.subr.mxu0 0.0
  %457 = vmatpush2.msra.mxu0 0.0
  %458 = vmatprep.subr.mxu0 0.0
  %459 = vmatpush2.msra.mxu0 0.0
  %460 = vmatprep.subr.mxu0 0.0
  %461 = vmatpush2.msra.mxu0 0.0
  %462 = vmatprep.subr.mxu0 0.0
  %463 = vmatpush2.msra.mxu0 0.0
  %464 = vmatprep.subr.mxu0 0.0
  %465 = vmatpush2.msra.mxu0 0.0
  %466 = vmatprep.subr.mxu0 0.0
  %467 = vmatpush2.msra.mxu0 0.0
  %468 = vmatprep.subr.mxu0 0.0
  %469 = vmatpush2.msra.mxu0 0.0
  %470 = vmatprep.subr.mxu0 0.0
  %471 = vmatpush2.msra.mxu0 0.0
  %472 = vmatprep.subr.mxu0 0.0
  %473 = vmatpush2.msra.mxu0 0.0
  %474 = vmatprep.subr.mxu0 0.0
  %475 = vmatpush2.msra.mxu0 0.0
  %476 = vmatprep.subr.mxu0 0.0
  %477 = vmatpush2.msra.mxu0 0.0
  %478 = vmatprep.subr.mxu0 0.0
  %479 = vmatpush2.msra.mxu0 0.0
  %480 = vmatprep.subr.mxu0 0.0
  %481 = vmatpush2.msra.mxu0 0.0
  %482 = vmatprep.subr.mxu0 0.0
  %483 = vmatpush2.msra.mxu0 0.0
  %484 = vmatprep.mubr.f32.mxu0 0.0
  %485 = vmatmul.mubr.f32.gmra.mxu0 %v414
  %v486 = vpop.f32.mrf.mxu0
  %v487 = vadd.f32 0.0, %v486
  %v488 = vpop.f32.mrf.mxu0
  %489 = vdwg.mxu0
  %v490 = vmul.f32 %v487, 0.5
  %v491 = vmul.f32 %v487, 0.70710677
  %v492 = verf.f32.pop %v491
  %v493 = vadd.f32 %v492, 1.0
  %v494 = vmul.f32 %v490, %v493
  %v495 = vsel %vm243, %v494, 1.0
  %v496 = vld [vmem:[%s1 + $0xb0] sm:$0xff]
  %v497 = vld [vmem:[%s1 + $0xb8] sm:$0xff]
  %v498 = vld [vmem:[%s1 + $0xc0] sm:$0xff]
  %v499 = vld [vmem:[%s1 + $0xc8] sm:$0xff]
  %v500 = vld [vmem:[%s1 + $0xd0] sm:$0xff]
  %v501 = vld [vmem:[%s1 + $0xd8] sm:$0xff]
  %v502 = vld [vmem:[%s1 + $0xe0] sm:$0xff]
  %v503 = vld [vmem:[%s1 + $0xe8] sm:$0xff]
  %v504 = vld [vmem:[%s1 + $0xf0] sm:$0xff]
  %v505 = vld [vmem:[%s1 + $0xf8] sm:$0xff]
  %v506 = vld [vmem:[%s1 + $0x100] sm:$0xff]
  %v507 = vld [vmem:[%s1 + $0x108] sm:$0xff]
  %v508 = vld [vmem:[%s1 + $0x110] sm:$0x1f]
  %v510 = vsel %vm260, %v495, 0
  %v513 = vsel %vm34, %v508, 0
  %515 = vmatprep.subr.mxu0 0.0
  %516 = vmatpush1.msra.mxu0 0.0
  %517 = vmatprep.subr.mxu0 0.0
  %518 = vmatpush1.msra.mxu0 0.0
  %519 = vmatprep.subr.mxu0 0.0
  %520 = vmatpush1.msra.mxu0 0.0
  %521 = vmatprep.subr.mxu0 0.0
  %522 = vmatpush1.msra.mxu0 %v513
  %523 = vmatprep.subr.mxu0 0.0
  %524 = vmatpush1.msra.mxu0 %v507
  %525 = vmatprep.subr.mxu0 0.0
  %526 = vmatpush1.msra.mxu0 %v506
  %527 = vmatprep.subr.mxu0 0.0
  %528 = vmatpush1.msra.mxu0 %v505
  %529 = vmatprep.subr.mxu0 0.0
  %530 = vmatpush1.msra.mxu0 %v504
  %531 = vmatprep.subr.mxu0 0.0
  %532 = vmatpush1.msra.mxu0 %v503
  %533 = vmatprep.subr.mxu0 0.0
  %534 = vmatpush1.msra.mxu0 %v502
  %535 = vmatprep.subr.mxu0 0.0
  %536 = vmatpush1.msra.mxu0 %v501
  %537 = vmatprep.subr.mxu0 0.0
  %538 = vmatpush1.msra.mxu0 %v500
  %539 = vmatprep.subr.mxu0 0.0
  %540 = vmatpush1.msra.mxu0 %v499
  %541 = vmatprep.subr.mxu0 0.0
  %542 = vmatpush1.msra.mxu0 %v498
  %543 = vmatprep.subr.mxu0 0.0
  %544 = vmatpush1.msra.mxu0 %v497
  %545 = vmatprep.subr.mxu0 0.0
  %546 = vmatpush1.msra.mxu0 %v496
  %547 = vmatprep.subr.mxu0 0.0
  %548 = vmatpush2.msra.mxu0 0.0
  %549 = vmatprep.subr.mxu0 0.0
  %550 = vmatpush2.msra.mxu0 0.0
  %551 = vmatprep.subr.mxu0 0.0
  %552 = vmatpush2.msra.mxu0 0.0
  %553 = vmatprep.subr.mxu0 0.0
  %554 = vmatpush2.msra.mxu0 0.0
  %555 = vmatprep.subr.mxu0 0.0
  %556 = vmatpush2.msra.mxu0 0.0
  %557 = vmatprep.subr.mxu0 0.0
  %558 = vmatpush2.msra.mxu0 0.0
  %559 = vmatprep.subr.mxu0 0.0
  %560 = vmatpush2.msra.mxu0 0.0
  %561 = vmatprep.subr.mxu0 0.0
  %562 = vmatpush2.msra.mxu0 0.0
  %563 = vmatprep.subr.mxu0 0.0
  %564 = vmatpush2.msra.mxu0 0.0
  %565 = vmatprep.subr.mxu0 0.0
  %566 = vmatpush2.msra.mxu0 0.0
  %567 = vmatprep.subr.mxu0 0.0
  %568 = vmatpush2.msra.mxu0 0.0
  %569 = vmatprep.subr.mxu0 0.0
  %570 = vmatpush2.msra.mxu0 0.0
  %571 = vmatprep.subr.mxu0 0.0
  %572 = vmatpush2.msra.mxu0 0.0
  %573 = vmatprep.subr.mxu0 0.0
  %574 = vmatpush2.msra.mxu0 0.0
  %575 = vmatprep.subr.mxu0 0.0
  %576 = vmatpush2.msra.mxu0 0.0
  %577 = vmatprep.subr.mxu0 0.0
  %578 = vmatpush2.msra.mxu0 0.0
  %579 = vmatprep.mubr.f32.mxu0 0.0
  %580 = vmatmul.mubr.f32.gmra.mxu0 %v510
  %v581 = vpop.f32.mrf.mxu0
  %v582 = vadd.f32 0.0, %v581
  %v583 = vpop.f32.mrf.mxu0
  %584 = vdwg.mxu0
  %585 = vst [vmem:[%s2] sm:$0x3] %v582
  // Predicated region
  $region10: #{dual_cnn_forward.1} parent=0 // pred_check
    _
  $region11: #{dual_cnn_forward.1} parent=0 // pred_check_branch
    %587 = sbr.rel (0) target = $region13
  $region12: #{dual_cnn_forward.1} parent=0 // pred_region
    _
  $region13: #{dual_cnn_forward.1} parent=0 // pred_fallthru
    _
  // Predicated region
  $region14: #{dual_cnn_forward.1} parent=0 // pred_check
    _
  $region15: #{dual_cnn_forward.1} parent=0 // pred_check_branch
    %589 = sbr.rel (0) target = $region17
  $region16: #{dual_cnn_forward.1} parent=0 // pred_region
    _
  $region17: #{dual_cnn_forward.1} parent=0 // pred_fallthru
    _

</llo_original>
